<compile_context>
chip_gen: v6e
topology: v6e:2x2x1
jax: 0.10.0
libtpu: 0.0.40
codegen_flags: <defaults>
</compile_context>

<pallas_src>
import functools

import jax
import jax.numpy as jnp
from jax.experimental import pallas as pl
from jax.experimental.pallas import tpu as pltpu


def _valuenet_kernel(num_hidden, *refs):
    """Fused forward: (Linear -> ReLU) * num_hidden -> Linear(., 1).

    refs layout:
      refs[0]                      : x_ref  (TB, state_dim)        -- batch tile
      refs[1 + 2*i], refs[2 + 2*i] : w_i (in, out), b_i (1, out),  i < num_hidden
      refs[1 + 2*num_hidden]       : head weight (1, hidden[-1])    (row vector)
      refs[2 + 2*num_hidden]       : head bias   (1, 1)
      refs[-1]                     : out_ref (1, TB)                -- lane-dense row
    """
    x_ref = refs[0]
    out_ref = refs[-1]
    p = refs[1:-1]

    compute_dtype = x_ref.dtype
    h = x_ref[...]                                   # (TB, S)

    # Hidden layers: Linear (MXU, f32 accumulation) + bias + ReLU (VPU).
    for i in range(num_hidden):
        w = p[2 * i][...]                            # (in, out) -- MXU-native
        b = p[2 * i + 1][...]                        # (1, out)
        acc = jnp.dot(h, w, preferred_element_type=jnp.float32)
        # bias + ReLU in f32; cast back to the compute dtype for the next MXU
        # feed (no-op when compute dtype is f32).
        h = jnp.maximum(acc + b.astype(jnp.float32), 0.0).astype(compute_dtype)

    # Head: output width 1 -> VPU multiply + lane reduction, no MXU push.
    wh = p[2 * num_hidden][...].astype(jnp.float32)      # (1, hidden[-1])
    bh = p[2 * num_hidden + 1][...].astype(jnp.float32)  # (1, 1)
    v_col = jnp.sum(h.astype(jnp.float32) * wh, axis=-1, keepdims=True) + bh  # (TB, 1)

    # Lane-dense store: (TB,1) -> (1,TB) via one small XLU transpose, so the
    # output store is a dense (unmasked) vst instead of per-row vst.msk and
    # the VMEM output buffer is not lane-padded 128x.
    out_ref[...] = jnp.transpose(v_col).astype(out_ref.dtype)


def value_net_forward(x, params, *, block_b=4096, compute_dtype=None):
    """Fused valueNet forward.

    params: list of (W, b) with W shape (out, in), b shape (out,) -- PyTorch
    nn.Linear layout.  `compute_dtype=jnp.bfloat16` is an optional v6e/v7x
    fast path (f32 accumulation is kept); the default f32 matches the PyTorch
    reference numerics (and should stay the default on v5e).
    `block_b` may be raised to 8192-16384 on v5e/v6e (128 MiB VMEM parts) for
    very large batches; the 48 MiB scoped-VMEM limit below is sized so the
    default 4096 tile also fits comfortably on v7x (64 MiB/TC).
    """
    num_hidden = len(params) - 1
    B, S = x.shape

    if compute_dtype is not None:
        x = x.astype(compute_dtype)
        params = [(jnp.asarray(w).astype(compute_dtype),
                   jnp.asarray(b).astype(compute_dtype)) for (w, b) in params]

    # Batch tile: whole array if it fits in one block, otherwise a 128-aligned
    # tile (satisfies the (8,128) BlockSpec rule and keeps the lane-dense
    # output block 128-divisible).  Partial last blocks are handled by Pallas
    # read-padding; padded rows only affect their own (discarded) outputs.
    if B <= block_b:
        tb = B
        num_blocks = 1
    else:
        tb = max(128, (block_b // 128) * 128)
        num_blocks = pl.cdiv(B, tb)
    grid = (num_blocks,)

    # One-time XLA-side layout plumbing (weights are tiny):
    #   hidden W -> (in, out), biases -> (1, out); head weight -> (1, H) row.
    flat_inputs = [x]
    in_specs = [pl.BlockSpec((tb, S), lambda i: (i, 0))]
    for (w, b) in params[:-1]:
        wt = jnp.asarray(w).T                    # (in, out) -- MXU-native
        b2 = jnp.asarray(b).reshape(1, -1)       # (1, out)
        flat_inputs += [wt, b2]
        in_specs += [
            pl.BlockSpec(wt.shape, lambda i: (0, 0)),   # VMEM-resident across grid
            pl.BlockSpec(b2.shape, lambda i: (0, 0)),
        ]
    wh, bh = params[-1]
    wh2 = jnp.asarray(wh).reshape(1, -1)         # (1, hidden[-1])
    bh2 = jnp.asarray(bh).reshape(1, 1)          # (1, 1)
    flat_inputs += [wh2, bh2]
    in_specs += [
        pl.BlockSpec(wh2.shape, lambda i: (0, 0)),
        pl.BlockSpec(bh2.shape, lambda i: (0, 0)),
    ]

    # Lane-dense output slab: one (1, tb) row per grid step, reshaped back to
    # (B, 1) below.  Last two block dims are (1, tb): the sublane dim equals
    # the full array dim (1) and tb is either the full width or a multiple of
    # 128, so the (8,128) rule is satisfied for every shape.
    out_spec = pl.BlockSpec((1, tb), lambda i: (0, i))
    out_shape = jax.ShapeDtypeStruct((1, num_blocks * tb), jnp.float32)

    kernel = functools.partial(_valuenet_kernel, num_hidden)
    out_slab = pl.pallas_call(
        kernel,
        out_shape=out_shape,
        grid=grid,
        in_specs=in_specs,
        out_specs=out_spec,
        compiler_params=pltpu.CompilerParams(
            dimension_semantics=("parallel",),      # 2-TC sharding on v7x
            vmem_limit_bytes=48 * 1024 * 1024,      # headroom under v7x 64 MiB/TC
        ),
    )(*flat_inputs)

    # Drop padded tail rows (if B % tb != 0) and restore the (B, 1) shape.
    return out_slab.reshape(-1)[:B].reshape(B, 1)


def init_params(key, state_dim, hidden_layers_dim):
    """Deterministic init matching nn.Linear shapes: W (out, in), b (out,)."""
    params = []
    dims_in = [state_dim] + list(hidden_layers_dim[:-1])
    dims_out = list(hidden_layers_dim)
    for d_in, d_out in zip(dims_in, dims_out):
        key, kw, kb = jax.random.split(key, 3)
        bound = 1.0 / jnp.sqrt(d_in)
        w = jax.random.uniform(kw, (d_out, d_in), jnp.float32, -bound, bound)
        b = jax.random.uniform(kb, (d_out,), jnp.float32, -bound, bound)
        params.append((w, b))
    d_in = hidden_layers_dim[-1]
    key, kw, kb = jax.random.split(key, 3)
    bound = 1.0 / jnp.sqrt(d_in)
    wh = jax.random.uniform(kw, (1, d_in), jnp.float32, -bound, bound)
    bh = jax.random.uniform(kb, (1,), jnp.float32, -bound, bound)
    params.append((wh, bh))
    return params


def reference_forward(x, params):
    h = x
    for (w, b) in params[:-1]:
        h = jnp.maximum(h @ w.T + b, 0.0)
    wh, bh = params[-1]
    return h @ wh.T + bh


if __name__ == "__main__":
    key = jax.random.PRNGKey(0)
    state_dim = 8
    hidden_layers_dim = [32, 32]

    params = init_params(key, state_dim, hidden_layers_dim)

    # 1) Small shape: single grid step (block == full array), exercises the
    #    lane-dense output path with a tiny, non-128-aligned batch.
    key, kx = jax.random.split(key)
    x_small = jax.random.normal(kx, (4, state_dim), jnp.float32)
    out_small = jax.block_until_ready(value_net_forward(x_small, params))
    ref_small = reference_forward(x_small, params)
    assert out_small.shape == (4, 1), out_small.shape
    assert jnp.allclose(out_small, ref_small, atol=1e-5, rtol=1e-5)

    # 2) Multi-tile grid with a partial last block (exercises pipelining,
    #    128-aligned tiling, padded reads and the sliced lane-dense slab).
    key, kx2 = jax.random.split(key)
    x_big = jax.random.normal(kx2, (200, state_dim), jnp.float32)
    out_big = jax.block_until_ready(value_net_forward(x_big, params, block_b=128))
    ref_big = reference_forward(x_big, params)
    assert out_big.shape == (200, 1), out_big.shape
    assert jnp.allclose(out_big, ref_big, atol=1e-5, rtol=1e-5)

    # 3) Optional bf16 compute path (v6e/v7x fast path; f32 accumulation kept).
    out_bf16 = jax.block_until_ready(
        value_net_forward(x_big, params, block_b=128, compute_dtype=jnp.bfloat16))
    assert out_bf16.shape == (200, 1), out_bf16.shape
    assert jnp.allclose(out_bf16, ref_big, atol=5e-2, rtol=5e-2)

    print("KERNEL_OK")
</pallas_src>

<mosaic_0001>
module attributes {stable_mosaic.version = 11 : i64} {
  func.func @_valuenet_kernel(%arg0: i32, %arg1: memref<4x8xf32, #tpu.memory_space<vmem>>, %arg2: memref<8x32xf32, #tpu.memory_space<vmem>>, %arg3: memref<1x32xf32, #tpu.memory_space<vmem>>, %arg4: memref<32x32xf32, #tpu.memory_space<vmem>>, %arg5: memref<1x32xf32, #tpu.memory_space<vmem>>, %arg6: memref<1x32xf32, #tpu.memory_space<vmem>>, %arg7: memref<1x1xf32, #tpu.memory_space<vmem>>, %arg8: memref<1x4xf32, #tpu.memory_space<vmem>>) attributes {dimension_semantics = [#tpu.dimension_semantics<parallel>], iteration_bounds = array<i64: 1>, scalar_prefetch = 0 : i64, scratch_operands = 0 : i64, tpu.core_type = #tpu.core_type<tc>, window_params = [{transform_indices = @transform_0, window_bounds = array<i64: 4, 8>}, {pipeline_mode = #tpu.pipeline_mode<synchronous>, transform_indices = @transform_1, window_bounds = array<i64: 8, 32>}, {pipeline_mode = #tpu.pipeline_mode<synchronous>, transform_indices = @transform_2, window_bounds = array<i64: 1, 32>}, {pipeline_mode = #tpu.pipeline_mode<synchronous>, transform_indices = @transform_3, window_bounds = array<i64: 32, 32>}, {pipeline_mode = #tpu.pipeline_mode<synchronous>, transform_indices = @transform_4, window_bounds = array<i64: 1, 32>}, {pipeline_mode = #tpu.pipeline_mode<synchronous>, transform_indices = @transform_5, window_bounds = array<i64: 1, 32>}, {pipeline_mode = #tpu.pipeline_mode<synchronous>, transform_indices = @transform_6, window_bounds = array<i64: 1, 1>}, {transform_indices = @transform_7, window_bounds = array<i64: 1, 4>}]} {
    %c0 = arith.constant 0 : index
    %c0_0 = arith.constant 0 : index
    %0 = vector.load %arg1[%c0, %c0_0] : memref<4x8xf32, #tpu.memory_space<vmem>>, vector<4x8xf32>
    %c0_1 = arith.constant 0 : index
    %c0_2 = arith.constant 0 : index
    %1 = vector.load %arg2[%c0_1, %c0_2] : memref<8x32xf32, #tpu.memory_space<vmem>>, vector<8x32xf32>
    %c0_3 = arith.constant 0 : index
    %c0_4 = arith.constant 0 : index
    %2 = vector.load %arg3[%c0_3, %c0_4] : memref<1x32xf32, #tpu.memory_space<vmem>>, vector<1x32xf32>
    %cst = arith.constant dense<0.000000e+00> : vector<4x32xf32>
    %3 = tpu.matmul %0, %1, %cst {dimension_numbers = #tpu.dot_dimension_numbers<[1], [0], [0], [1], [0, 0, 1, 1], [], []>} : vector<4x8xf32>, vector<8x32xf32>, vector<4x32xf32> -> vector<4x32xf32>
    %4 = vector.broadcast %2 : vector<1x32xf32> to vector<4x32xf32>
    %5 = arith.addf %3, %4 : vector<4x32xf32>
    %cst_5 = arith.constant 0.000000e+00 : f32
    %6 = vector.broadcast %cst_5 : f32 to vector<4x32xf32>
    %7 = arith.maximumf %5, %6 : vector<4x32xf32>
    %c0_6 = arith.constant 0 : index
    %c0_7 = arith.constant 0 : index
    %8 = vector.load %arg4[%c0_6, %c0_7] : memref<32x32xf32, #tpu.memory_space<vmem>>, vector<32x32xf32>
    %c0_8 = arith.constant 0 : index
    %c0_9 = arith.constant 0 : index
    %9 = vector.load %arg5[%c0_8, %c0_9] : memref<1x32xf32, #tpu.memory_space<vmem>>, vector<1x32xf32>
    %cst_10 = arith.constant dense<0.000000e+00> : vector<4x32xf32>
    %10 = tpu.matmul %7, %8, %cst_10 {dimension_numbers = #tpu.dot_dimension_numbers<[1], [0], [0], [1], [0, 0, 1, 1], [], []>} : vector<4x32xf32>, vector<32x32xf32>, vector<4x32xf32> -> vector<4x32xf32>
    %11 = vector.broadcast %9 : vector<1x32xf32> to vector<4x32xf32>
    %12 = arith.addf %10, %11 : vector<4x32xf32>
    %cst_11 = arith.constant 0.000000e+00 : f32
    %13 = vector.broadcast %cst_11 : f32 to vector<4x32xf32>
    %14 = arith.maximumf %12, %13 : vector<4x32xf32>
    %c0_12 = arith.constant 0 : index
    %c0_13 = arith.constant 0 : index
    %15 = vector.load %arg6[%c0_12, %c0_13] : memref<1x32xf32, #tpu.memory_space<vmem>>, vector<1x32xf32>
    %c0_14 = arith.constant 0 : index
    %c0_15 = arith.constant 0 : index
    %16 = vector.load %arg7[%c0_14, %c0_15] : memref<1x1xf32, #tpu.memory_space<vmem>>, vector<1x1xf32>
    %17 = vector.broadcast %15 : vector<1x32xf32> to vector<4x32xf32>
    %18 = arith.mulf %14, %17 : vector<4x32xf32>
    %cst_16 = arith.constant dense<0.000000e+00> : vector<4xf32>
    %19 = vector.multi_reduction <add>, %18, %cst_16 [1] : vector<4x32xf32> to vector<4xf32>
    %20 = vector.shape_cast %19 : vector<4xf32> to vector<4x1xf32>
    %21 = vector.broadcast %16 : vector<1x1xf32> to vector<4x1xf32>
    %22 = arith.addf %20, %21 : vector<4x1xf32>
    %23 = tpu.transpose %22, [1, 0] : vector<4x1xf32> -> vector<1x4xf32>
    %c0_17 = arith.constant 0 : index
    %c0_18 = arith.constant 0 : index
    %24 = vector.load %arg8[%c0_17, %c0_18] : memref<1x4xf32, #tpu.memory_space<vmem>>, vector<1x4xf32>
    tpu.vector_store %arg8[%c0_17, %c0_18], %23 {strides = array<i32>} : memref<1x4xf32, #tpu.memory_space<vmem>>, vector<1x4xf32>,
    return
  }
  func.func @transform_0(%arg0: i32) -> (i32, i32) {
    %c0_i32 = arith.constant 0 : i32
    %c0_i32_0 = arith.constant 0 : i32
    return %arg0, %c0_i32 : i32, i32
  }
  func.func @transform_1(%arg0: i32) -> (i32, i32) {
    %c0_i32 = arith.constant 0 : i32
    %c0_i32_0 = arith.constant 0 : i32
    %c0_i32_1 = arith.constant 0 : i32
    return %c0_i32, %c0_i32_0 : i32, i32
  }
  func.func @transform_2(%arg0: i32) -> (i32, i32) {
    %c0_i32 = arith.constant 0 : i32
    %c0_i32_0 = arith.constant 0 : i32
    %c0_i32_1 = arith.constant 0 : i32
    return %c0_i32, %c0_i32_0 : i32, i32
  }
  func.func @transform_3(%arg0: i32) -> (i32, i32) {
    %c0_i32 = arith.constant 0 : i32
    %c0_i32_0 = arith.constant 0 : i32
    %c0_i32_1 = arith.constant 0 : i32
    return %c0_i32, %c0_i32_0 : i32, i32
  }
  func.func @transform_4(%arg0: i32) -> (i32, i32) {
    %c0_i32 = arith.constant 0 : i32
    %c0_i32_0 = arith.constant 0 : i32
    %c0_i32_1 = arith.constant 0 : i32
    return %c0_i32, %c0_i32_0 : i32, i32
  }
  func.func @transform_5(%arg0: i32) -> (i32, i32) {
    %c0_i32 = arith.constant 0 : i32
    %c0_i32_0 = arith.constant 0 : i32
    %c0_i32_1 = arith.constant 0 : i32
    return %c0_i32, %c0_i32_0 : i32, i32
  }
  func.func @transform_6(%arg0: i32) -> (i32, i32) {
    %c0_i32 = arith.constant 0 : i32
    %c0_i32_0 = arith.constant 0 : i32
    %c0_i32_1 = arith.constant 0 : i32
    return %c0_i32, %c0_i32_0 : i32, i32
  }
  func.func @transform_7(%arg0: i32) -> (i32, i32) {
    %c0_i32 = arith.constant 0 : i32
    %c0_i32_0 = arith.constant 0 : i32
    return %c0_i32, %arg0 : i32, i32
  }
}

</mosaic_0001>

<llo_original>
// kernel: tpu_custom_call.1
$region0: #{tpu_custom_call.1}
  #allocation0 [shape = 'u32[]', space=smem, size = 0x4, offset = 0x4, fixed_abs, tag = 'smem constant byte address 0x4 - core index']
  #allocation1 [shape = 'u32[144,128]{1,0:T(1,128)}', space=vmem, size = 0x12000, scoped, tag = 'internal scratch']
  #allocation2 [shape = 'f32[1,1]{1,0:T(1,128)S(1)}', space=vmem, size = 0x200, scoped, tag = 'scoped memory for tpu_custom_call.1']
  %s0 = inlined_call_operand.hbm [shape: f32[4,8], index: 0, kind: input, shape index: {}]
  %s1 = inlined_call_operand.hbm [shape: f32[8,32], index: 1, kind: input, shape index: {}]
  %s2 = inlined_call_operand.vmem [shape: f32[1,32], index: 2, kind: input, shape index: {}]
  %s3 = inlined_call_operand.hbm [shape: f32[32,32], index: 3, kind: input, shape index: {}]
  %s4 = inlined_call_operand.vmem [shape: f32[1,32], index: 4, kind: input, shape index: {}]
  %s5 = inlined_call_operand.vmem [shape: f32[1,32], index: 5, kind: input, shape index: {}]
  %s6 = inlined_call_operand.<no memory space> [shape: f32[1,1], index: 6, kind: input, shape index: {}]
  %s7 = inlined_call_operand.hbm [shape: f32[1,4], index: 7, kind: output, shape index: {}]
  %s8 = sld [smem:[#allocation0]]
  $region50: #{tpu_custom_call.1} parent=0
    _
  %s10 = ssub.s32 1, %s8
  %s11 = scalar_select 0, %s10, %s8
  %v12 = vstv %s6
  %13 = vst [vmem:[#allocation2] sm:$0x1] %v12
  $region1: #{tpu_custom_call.1} parent=0
    #allocation3 [shape = 'u8[2048]{0}', space=vmem, size = 0x800, scoped, tag = 'input window, operand 0, single buffered']
    #allocation4 [shape = 's32[1]{0}', space=sflag, size = 0x4, scoped, tag = 'scoped memory for tpu_custom_call.1']
    #allocation5 [shape = 's32[1]{0}', space=sflag, size = 0x4, scoped, tag = 'scoped memory for tpu_custom_call.1']
    #allocation6 [shape = 'u8[4096]{0}', space=vmem, size = 0x1000, scoped, tag = 'input window, operand 1, single buffered']
    #allocation7 [shape = 's32[1]{0}', space=sflag, size = 0x4, scoped, tag = 'scoped memory for tpu_custom_call.1']
    #allocation8 [shape = 'u8[16384]{0}', space=vmem, size = 0x4000, scoped, tag = 'input window, operand 3, single buffered']
    #allocation9 [shape = 'u8[512]{0}', space=vmem, size = 0x400, scoped, tag = 'output window, operand 0, single buffered']
    %14 = vsyncpa [#allocation4], 0
    %15 = vsyncpa [#allocation7], 0
    %16 = vsyncpa [#allocation5], 0
    // Predicated region
    $region2: #{tpu_custom_call.1} parent=1 // pred_check
      _
    $region3: #{tpu_custom_call.1} parent=1 // pred_check_branch
      %18 = sbr.rel (0) target = $region5
    $region4: #{tpu_custom_call.1} parent=1 // pred_region
      %s20 = ssub.s32 64, 64
      %21 = vsyncadd [#allocation4], %s20
      %s23 = sshll.u32 [#allocation3], 4
      %s24 = int_to_ptr.vmem [resolvable:$true] %s23
      %26 = dma.hbm_to_vmem [thread:$0]  %s0, 64, %s24, [#allocation4]
    $region5: #{tpu_custom_call.1} parent=1 // pred_fallthru
      _
    // Predicated region
    $region6: #{tpu_custom_call.1} parent=1 // pred_check
      _
    $region7: #{tpu_custom_call.1} parent=1 // pred_check_branch
      %28 = sbr.rel (0) target = $region9
    $region8: #{tpu_custom_call.1} parent=1 // pred_region
      %s30 = ssub.s32 128, 128
      %31 = vsyncadd [#allocation7], %s30
      %s33 = sshll.u32 [#allocation6], 4
      %s34 = int_to_ptr.vmem [resolvable:$true] %s33
      %36 = dma.hbm_to_vmem [thread:$0]  %s1, 128, %s34, [#allocation7]
    $region9: #{tpu_custom_call.1} parent=1 // pred_fallthru
      _
    // Predicated region
    $region10: #{tpu_custom_call.1} parent=1 // pred_check
      _
    $region11: #{tpu_custom_call.1} parent=1 // pred_check_branch
      %38 = sbr.rel (0) target = $region13
    $region12: #{tpu_custom_call.1} parent=1 // pred_region
      _
    $region13: #{tpu_custom_call.1} parent=1 // pred_fallthru
      _
    // Predicated region
    $region14: #{tpu_custom_call.1} parent=1 // pred_check
      _
    $region15: #{tpu_custom_call.1} parent=1 // pred_check_branch
      %40 = sbr.rel (0) target = $region17
    $region16: #{tpu_custom_call.1} parent=1 // pred_region
      %s42 = ssub.s32 512, 512
      %43 = vsyncadd [#allocation7], %s42
      %s44 = sshll.u32 [#allocation8], 4
      %s45 = int_to_ptr.vmem [resolvable:$true] %s44
      %50 = dma.hbm_to_vmem [thread:$0]  %s3, 512, %s45, [#allocation7], 128, 128, 8
    $region17: #{tpu_custom_call.1} parent=1 // pred_fallthru
      _
    // Predicated region
    $region18: #{tpu_custom_call.1} parent=1 // pred_check
      _
    $region19: #{tpu_custom_call.1} parent=1 // pred_check_branch
      %52 = sbr.rel (0) target = $region21
    $region20: #{tpu_custom_call.1} parent=1 // pred_region
      _
    $region21: #{tpu_custom_call.1} parent=1 // pred_fallthru
      _
    // Predicated region
    $region22: #{tpu_custom_call.1} parent=1 // pred_check
      _
    $region23: #{tpu_custom_call.1} parent=1 // pred_check_branch
      %54 = sbr.rel (0) target = $region25
    $region24: #{tpu_custom_call.1} parent=1 // pred_region
      _
    $region25: #{tpu_custom_call.1} parent=1 // pred_fallthru
      _
    // Predicated region
    $region26: #{tpu_custom_call.1} parent=1 // pred_check
      _
    $region27: #{tpu_custom_call.1} parent=1 // pred_check_branch
      %56 = sbr.rel (0) target = $region29
    $region28: #{tpu_custom_call.1} parent=1 // pred_region
      _
    $region29: #{tpu_custom_call.1} parent=1 // pred_fallthru
      _
    // Predicated region
    $region30: #{tpu_custom_call.1} parent=1 // pred_check
      _
    $region31: #{tpu_custom_call.1} parent=1 // pred_check_branch
      %58 = sbr.rel (0) target = $region33
    $region32: #{tpu_custom_call.1} parent=1 // pred_region
      %59 = dma.done [#allocation4], 64
    $region33: #{tpu_custom_call.1} parent=1 // pred_fallthru
      _
    // Predicated region
    $region34: #{tpu_custom_call.1} parent=1 // pred_check
      _
    $region35: #{tpu_custom_call.1} parent=1 // pred_check_branch
      %61 = sbr.rel (0) target = $region37
    $region36: #{tpu_custom_call.1} parent=1 // pred_region
      %62 = dma.done [#allocation7], 128
    $region37: #{tpu_custom_call.1} parent=1 // pred_fallthru
      _
    // Predicated region
    $region38: #{tpu_custom_call.1} parent=1 // pred_check
      _
    $region39: #{tpu_custom_call.1} parent=1 // pred_check_branch
      %64 = sbr.rel (0) target = $region41
    $region40: #{tpu_custom_call.1} parent=1 // pred_region
      %65 = dma.done [#allocation7], 512
    $region41: #{tpu_custom_call.1} parent=1 // pred_fallthru
      _
    %v66 = vld [vmem:[#allocation3] sm:$0xf]
    %v67 = vld [vmem:[#allocation6] sm:$0xff]
    %v68 = vld [vmem:[%s2] sm:$0x1]
    %v70 = vlaneseq
    %v71 = vshrl.u32 %v70, 7
    %v72 = vsub.s32 0, %v71
    %v73 = vrot.slane %v68, %v72
    %vm75 = vcmask 64512
    %v77 = vsel %vm75, %v66, 0
    %79 = vmatprep.subr.mxu0 0.0
    %80 = vmatpush1.msra.mxu0 0.0
    %81 = vmatprep.subr.mxu0 0.0
    %82 = vmatpush1.msra.mxu0 0.0
    %83 = vmatprep.subr.mxu0 0.0
    %84 = vmatpush1.msra.mxu0 0.0
    %85 = vmatprep.subr.mxu0 0.0
    %86 = vmatpush1.msra.mxu0 0.0
    %87 = vmatprep.subr.mxu0 0.0
    %88 = vmatpush1.msra.mxu0 0.0
    %89 = vmatprep.subr.mxu0 0.0
    %90 = vmatpush1.msra.mxu0 0.0
    %91 = vmatprep.subr.mxu0 0.0
    %92 = vmatpush1.msra.mxu0 0.0
    %93 = vmatprep.subr.mxu0 0.0
    %94 = vmatpush1.msra.mxu0 0.0
    %95 = vmatprep.subr.mxu0 0.0
    %96 = vmatpush1.msra.mxu0 0.0
    %97 = vmatprep.subr.mxu0 0.0
    %98 = vmatpush1.msra.mxu0 0.0
    %99 = vmatprep.subr.mxu0 0.0
    %100 = vmatpush1.msra.mxu0 0.0
    %101 = vmatprep.subr.mxu0 0.0
    %102 = vmatpush1.msra.mxu0 0.0
    %103 = vmatprep.subr.mxu0 0.0
    %104 = vmatpush1.msra.mxu0 0.0
    %105 = vmatprep.subr.mxu0 0.0
    %106 = vmatpush1.msra.mxu0 0.0
    %107 = vmatprep.subr.mxu0 0.0
    %108 = vmatpush1.msra.mxu0 0.0
    %109 = vmatprep.subr.mxu0 0.0
    %110 = vmatpush1.msra.mxu0 %v67
    %111 = vmatprep.subr.mxu0 0.0
    %112 = vmatpush2.msra.mxu0 0.0
    %113 = vmatprep.subr.mxu0 0.0
    %114 = vmatpush2.msra.mxu0 0.0
    %115 = vmatprep.subr.mxu0 0.0
    %116 = vmatpush2.msra.mxu0 0.0
    %117 = vmatprep.subr.mxu0 0.0
    %118 = vmatpush2.msra.mxu0 0.0
    %119 = vmatprep.subr.mxu0 0.0
    %120 = vmatpush2.msra.mxu0 0.0
    %121 = vmatprep.subr.mxu0 0.0
    %122 = vmatpush2.msra.mxu0 0.0
    %123 = vmatprep.subr.mxu0 0.0
    %124 = vmatpush2.msra.mxu0 0.0
    %125 = vmatprep.subr.mxu0 0.0
    %126 = vmatpush2.msra.mxu0 0.0
    %127 = vmatprep.subr.mxu0 0.0
    %128 = vmatpush2.msra.mxu0 0.0
    %129 = vmatprep.subr.mxu0 0.0
    %130 = vmatpush2.msra.mxu0 0.0
    %131 = vmatprep.subr.mxu0 0.0
    %132 = vmatpush2.msra.mxu0 0.0
    %133 = vmatprep.subr.mxu0 0.0
    %134 = vmatpush2.msra.mxu0 0.0
    %135 = vmatprep.subr.mxu0 0.0
    %136 = vmatpush2.msra.mxu0 0.0
    %137 = vmatprep.subr.mxu0 0.0
    %138 = vmatpush2.msra.mxu0 0.0
    %139 = vmatprep.subr.mxu0 0.0
    %140 = vmatpush2.msra.mxu0 0.0
    %141 = vmatprep.subr.mxu0 0.0
    %142 = vmatpush2.msra.mxu0 0.0
    %143 = vmatprep.mubr.f32.mxu0 0.0
    %144 = vmatmul.mubr.f32.gmra.mxu0 %v77
    %v145 = vpop.f32.mrf.mxu0
    %v146 = vadd.f32 %v73, %v145
    %v147 = vpop.f32.mrf.mxu0
    %148 = vdwg.mxu0
    %v149 = vmax.f32 %v146, 0.0
    %v150 = vld [vmem:[#allocation8] sm:$0xff]
    %v151 = vld [vmem:[#allocation8 + $0x8] sm:$0xff]
    %v152 = vld [vmem:[#allocation8 + $0x10] sm:$0xff]
    %v153 = vld [vmem:[#allocation8 + $0x18] sm:$0xff]
    %v154 = vld [vmem:[%s4] sm:$0x1]
    %v156 = vlaneseq
    %v157 = vshrl.u32 %v156, 7
    %v158 = vsub.s32 0, %v157
    %v159 = vrot.slane %v154, %v158
    %vm161 = vcmask 261120
    %v163 = vsel %vm161, %v149, 0
    %165 = vmatprep.subr.mxu0 0.0
    %166 = vmatpush1.msra.mxu0 0.0
    %167 = vmatprep.subr.mxu0 0.0
    %168 = vmatpush1.msra.mxu0 0.0
    %169 = vmatprep.subr.mxu0 0.0
    %170 = vmatpush1.msra.mxu0 0.0
    %171 = vmatprep.subr.mxu0 0.0
    %172 = vmatpush1.msra.mxu0 0.0
    %173 = vmatprep.subr.mxu0 0.0
    %174 = vmatpush1.msra.mxu0 0.0
    %175 = vmatprep.subr.mxu0 0.0
    %176 = vmatpush1.msra.mxu0 0.0
    %177 = vmatprep.subr.mxu0 0.0
    %178 = vmatpush1.msra.mxu0 0.0
    %179 = vmatprep.subr.mxu0 0.0
    %180 = vmatpush1.msra.mxu0 0.0
    %181 = vmatprep.subr.mxu0 0.0
    %182 = vmatpush1.msra.mxu0 0.0
    %183 = vmatprep.subr.mxu0 0.0
    %184 = vmatpush1.msra.mxu0 0.0
    %185 = vmatprep.subr.mxu0 0.0
    %186 = vmatpush1.msra.mxu0 0.0
    %187 = vmatprep.subr.mxu0 0.0
    %188 = vmatpush1.msra.mxu0 0.0
    %189 = vmatprep.subr.mxu0 0.0
    %190 = vmatpush1.msra.mxu0 %v153
    %191 = vmatprep.subr.mxu0 0.0
    %192 = vmatpush1.msra.mxu0 %v152
    %193 = vmatprep.subr.mxu0 0.0
    %194 = vmatpush1.msra.mxu0 %v151
    %195 = vmatprep.subr.mxu0 0.0
    %196 = vmatpush1.msra.mxu0 %v150
    %197 = vmatprep.subr.mxu0 0.0
    %198 = vmatpush2.msra.mxu0 0.0
    %199 = vmatprep.subr.mxu0 0.0
    %200 = vmatpush2.msra.mxu0 0.0
    %201 = vmatprep.subr.mxu0 0.0
    %202 = vmatpush2.msra.mxu0 0.0
    %203 = vmatprep.subr.mxu0 0.0
    %204 = vmatpush2.msra.mxu0 0.0
    %205 = vmatprep.subr.mxu0 0.0
    %206 = vmatpush2.msra.mxu0 0.0
    %207 = vmatprep.subr.mxu0 0.0
    %208 = vmatpush2.msra.mxu0 0.0
    %209 = vmatprep.subr.mxu0 0.0
    %210 = vmatpush2.msra.mxu0 0.0
    %211 = vmatprep.subr.mxu0 0.0
    %212 = vmatpush2.msra.mxu0 0.0
    %213 = vmatprep.subr.mxu0 0.0
    %214 = vmatpush2.msra.mxu0 0.0
    %215 = vmatprep.subr.mxu0 0.0
    %216 = vmatpush2.msra.mxu0 0.0
    %217 = vmatprep.subr.mxu0 0.0
    %218 = vmatpush2.msra.mxu0 0.0
    %219 = vmatprep.subr.mxu0 0.0
    %220 = vmatpush2.msra.mxu0 0.0
    %221 = vmatprep.subr.mxu0 0.0
    %222 = vmatpush2.msra.mxu0 0.0
    %223 = vmatprep.subr.mxu0 0.0
    %224 = vmatpush2.msra.mxu0 0.0
    %225 = vmatprep.subr.mxu0 0.0
    %226 = vmatpush2.msra.mxu0 0.0
    %227 = vmatprep.subr.mxu0 0.0
    %228 = vmatpush2.msra.mxu0 0.0
    %229 = vmatprep.mubr.f32.mxu0 0.0
    %230 = vmatmul.mubr.f32.gmra.mxu0 %v163
    %v231 = vpop.f32.mrf.mxu0
    %v232 = vadd.f32 %v159, %v231
    %v233 = vpop.f32.mrf.mxu0
    %234 = vdwg.mxu0
    %v235 = vmax.f32 %v232, 0.0
    %v236 = vld [vmem:[%s5] sm:$0x1]
    %v237 = vld [vmem:[#allocation2] sm:$0x1]
    %v239 = vlaneseq
    %v240 = vshrl.u32 %v239, 7
    %v241 = vsub.s32 0, %v240
    %v242 = vrot.slane %v236, %v241
    %v244 = vmul.f32 %v235, %v242
    %vm245 = vcmask 257024
    %v246 = vsel %vm245, %v244, 0.0
    %247 = vadd.xlane.f32.xlu0 %v246
    %v248 = vpop.xlane.xlu0 %247
    %v250 = vlaneseq
    %v251 = vshrl.u32 %v250, 7
    %v252 = vsub.s32 0, %v251
    %v253 = vrot.slane %v237, %v252
    %v255 = vadd.f32 %v248, %v253
    %256 = vxpose.xlu0.b32.start [1/16] %v255, 128
    %257 = vxpose.xlu0.b32.cont [2/16] 0.0, 128
    %258 = vxpose.xlu0.b32.cont [3/16] 0.0, 128
    %259 = vxpose.xlu0.b32.cont [4/16] 0.0, 128
    %260 = vxpose.xlu0.b32.cont [5/16] 0.0, 128
    %261 = vxpose.xlu0.b32.cont [6/16] 0.0, 128
    %262 = vxpose.xlu0.b32.cont [7/16] 0.0, 128
    %263 = vxpose.xlu0.b32.cont [8/16] 0.0, 128
    %264 = vxpose.xlu0.b32.cont [9/16] 0.0, 128
    %265 = vxpose.xlu0.b32.cont [10/16] 0.0, 128
    %266 = vxpose.xlu0.b32.cont [11/16] 0.0, 128
    %267 = vxpose.xlu0.b32.cont [12/16] 0.0, 128
    %268 = vxpose.xlu0.b32.cont [13/16] 0.0, 128
    %269 = vxpose.xlu0.b32.cont [14/16] 0.0, 128
    %270 = vxpose.xlu0.b32.cont [15/16] 0.0, 128
    %271 = vxpose.xlu0.b32.end [16/16] 0.0, 128
    %v272 = vpop.trf.xlu0
    %v273 = vpop.trf.xlu0
    %v274 = vpop.trf.xlu0
    %v275 = vpop.trf.xlu0
    %v276 = vpop.trf.xlu0
    %v277 = vpop.trf.xlu0
    %v278 = vpop.trf.xlu0
    %v279 = vpop.trf.xlu0
    %v280 = vpop.trf.xlu0
    %v281 = vpop.trf.xlu0
    %v282 = vpop.trf.xlu0
    %v283 = vpop.trf.xlu0
    %v284 = vpop.trf.xlu0
    %v285 = vpop.trf.xlu0
    %v286 = vpop.trf.xlu0
    %v287 = vpop.trf.xlu0
    %vm288 = vcmask 24576
    %289 = vst.msk [vmem:[#allocation9] sm:$0x1] %vm288, %v272
    // Predicated region
    $region42: #{tpu_custom_call.1} parent=1 // pred_check
      _
    $region43: #{tpu_custom_call.1} parent=1 // pred_check_branch
      %291 = sbr.rel (0) target = $region45
    $region44: #{tpu_custom_call.1} parent=1 // pred_region
      %s293 = ssub.s32 16, 16
      %294 = vsyncadd [#allocation5], %s293
      %s296 = sshll.u32 [#allocation9], 4
      %s297 = int_to_ptr.vmem [resolvable:$true] %s296
      %299 = dma.vmem_to_hbm [thread:$0]  %s297, 16, %s7, [#allocation5]
    $region45: #{tpu_custom_call.1} parent=1 // pred_fallthru
      _
    // Predicated region
    $region46: #{tpu_custom_call.1} parent=1 // pred_check
      _
    $region47: #{tpu_custom_call.1} parent=1 // pred_check_branch
      %301 = sbr.rel (0) target = $region49
    $region48: #{tpu_custom_call.1} parent=1 // pred_region
      %302 = dma.done [#allocation5], 16
    $region49: #{tpu_custom_call.1} parent=1 // pred_fallthru
      _
    %303 = vsyncpa [#allocation4], 1
    %304 = vsyncpa [#allocation7], 1
    %305 = vsyncpa [#allocation5], 1

</llo_original>
